<compile_context>
chip_gen: v6e
topology: v6e:2x2x1
jax: 0.10.0
libtpu: 0.0.40
codegen_flags: <defaults>
</compile_context>

<pallas_src>
import functools

import jax
import jax.numpy as jnp
import numpy as np
from jax.experimental import pallas as pl
from jax.experimental.pallas import tpu as pltpu

_LANES = 128
_PACK = 3 * _LANES  # 384 interleaved values = 128 pixels (r,g,b per pixel)


# ----------------------------- kernel helpers --------------------------------


def _newton_recip(x):
    """approx EUP reciprocal + one Newton step (error ~ eps^2, accuracy-safe)."""
    r = pl.reciprocal(x, approx=True)
    return r * (2.0 - x * r)


def _hsv_from_planes(r, g, b):
    """skimage.color.rgb2hsv semantics on dense (R, 128) per-channel planes."""
    maxc = jnp.maximum(jnp.maximum(r, g), b)
    minc = jnp.minimum(jnp.minimum(r, g), b)
    v = maxc
    delta = maxc - minc
    dzero = delta == 0.0  # computed once, reused for s and h

    inv_max = _newton_recip(jnp.where(maxc == 0.0, 1.0, maxc))
    s = jnp.where(dzero, 0.0, delta * inv_max)

    inv_delta = _newton_recip(jnp.where(dzero, 1.0, delta))
    h_r = (g - b) * inv_delta
    h_g = 2.0 + (b - r) * inv_delta
    h_b = 4.0 + (r - g) * inv_delta
    # skimage sequential-assignment priority on ties: blue > green > red.
    h = jnp.where(b == maxc, h_b, jnp.where(g == maxc, h_g, h_r))
    t = h * (1.0 / 6.0)
    h = t - jnp.floor(t)          # == (h/6) % 1.0, incl. negative hues
    h = jnp.where(dzero, 0.0, h)
    return h, s, v


def _deinterleave(x_f32, sel):
    """(R, 384) interleaved rgb -> three dense (R, 128) planes via MXU selection.

    hi/lo bf16 split keeps the permutation exact to ~2^-18 relative using only
    single-pass bf16 matmuls (no reliance on f32 dot `precision` handling).
    """
    hi = x_f32.astype(jnp.bfloat16)
    lo = (x_f32 - hi.astype(jnp.float32)).astype(jnp.bfloat16)
    y = (jnp.dot(hi, sel, preferred_element_type=jnp.float32)
         + jnp.dot(lo, sel, preferred_element_type=jnp.float32))
    # Slices at 128-lane tile boundaries: free views, no relayout.
    return y[:, 0:_LANES], y[:, _LANES:2 * _LANES], y[:, 2 * _LANES:3 * _LANES]


def bg_weights_kernel(scale_ref, sel_ref, gt_ref, bg_ref, out_ref):
    """scale_ref: SMEM (1,) f32 = exp(3*threshold)
       sel_ref  : VMEM (384, 384) bf16 constant channel-selection matrix
       gt_ref   : VMEM (block_rows, 384) f32 interleaved rgb
       bg_ref   : VMEM (block_rows, 384) f32 interleaved rgb
       out_ref  : VMEM (block_rows, 128) f32 weights (lane-dense, unmasked vst)
    """
    scale = scale_ref[0]
    sel = sel_ref[...]

    r1, g1, b1 = _deinterleave(gt_ref[...], sel)
    r2, g2, b2 = _deinterleave(bg_ref[...], sel)

    h1, s1, v1 = _hsv_from_planes(r1, g1, b1)
    h2, s2, v2 = _hsv_from_planes(r2, g2, b2)

    dh = h1 - h2
    ds = s1 - s2
    dv = v1 - v2
    diff = jnp.sqrt(dh * dh + ds * ds + dv * dv)

    # exp(-3 * (diff - threshold)) == exp(3*threshold) * exp(-3*diff)
    out_ref[...] = scale * jnp.exp(-3.0 * diff)


# ----------------------------- wrapper ----------------------------------------


@functools.partial(jax.jit, static_argnames=("max_block_rows",))
def bg_guided_sparsity_weights(gt, bg_map, threshold_param, *, max_block_rows=1024):
    """gt, bg_map: (B, H, W, 3) float32 RGB in [0, 1].  Returns (B, H, W) weights."""
    assert gt.shape == bg_map.shape and gt.shape[-1] == 3
    B, H, W, _ = gt.shape
    n = B * H * W

    # Scalar parameter transform (glue, plain JAX) folded into a single scale.
    threshold = 1.732 * (1.0 - jax.nn.sigmoid(threshold_param))
    scale = jnp.reshape(jnp.exp(3.0 * threshold), (1,)).astype(jnp.float32)

    rows = -(-n // _LANES)            # cdiv(n, 128) pixel-rows of 128 pixels
    n_pad = rows * _LANES

    def to_rows(x):
        # Natural channel-interleaved order is kept: this is a free reshape
        # (no transpose / relayout pass over HBM).  The pad copy only fires
        # when the pixel count is not a multiple of 128.
        flat = x.reshape(-1).astype(jnp.float32)
        if n_pad != n:
            flat = jnp.pad(flat, (0, (n_pad - n) * 3))
        return flat.reshape(rows, _PACK)

    gt_i = to_rows(gt)
    bg_i = to_rows(bg_map)

    # Channel-selection matrix: sel[k, 128*c + p] = 1 iff k == 3*p + c.
    # 0/1 values are exact in bf16; fetched into VMEM once (constant block idx).
    k_idx = jax.lax.broadcasted_iota(jnp.int32, (_PACK, _PACK), 0)
    j_idx = jax.lax.broadcasted_iota(jnp.int32, (_PACK, _PACK), 1)
    sel = (k_idx == 3 * (j_idx % _LANES) + j_idx // _LANES).astype(jnp.bfloat16)

    block_rows = rows if rows <= max_block_rows else max_block_rows
    grid = (pl.cdiv(rows, block_rows),)   # ragged tail handled by masked OOB

    out = pl.pallas_call(
        bg_weights_kernel,
        out_shape=jax.ShapeDtypeStruct((rows, _LANES), jnp.float32),
        grid=grid,
        in_specs=[
            pl.BlockSpec(memory_space=pltpu.MemorySpace.SMEM),            # scale
            pl.BlockSpec((_PACK, _PACK), lambda i: (0, 0)),               # sel (fetched once)
            pl.BlockSpec((block_rows, _PACK), lambda i: (i, 0)),          # gt slab
            pl.BlockSpec((block_rows, _PACK), lambda i: (i, 0)),          # bg slab
        ],
        out_specs=pl.BlockSpec((block_rows, _LANES), lambda i: (i, 0)),
        compiler_params=pltpu.CompilerParams(
            dimension_semantics=("parallel",),        # megacore-shardable on v7x
            vmem_limit_bytes=48 * 1024 * 1024),
    )(scale, sel, gt_i, bg_i)

    flat_out = out.reshape(n_pad)
    if n_pad != n:
        flat_out = flat_out[:n]
    return flat_out.reshape(B, H, W)


# ----------------------------- reference (plain JAX) --------------------------


def _reference(gt, bg_map, threshold_param):
    def rgb2hsv(x):
        r, g, b = x[..., 0], x[..., 1], x[..., 2]
        maxc = jnp.maximum(jnp.maximum(r, g), b)
        minc = jnp.minimum(jnp.minimum(r, g), b)
        v = maxc
        delta = maxc - minc
        safe_max = jnp.where(maxc == 0.0, 1.0, maxc)
        s = jnp.where(delta == 0.0, 0.0, delta / safe_max)
        safe_delta = jnp.where(delta == 0.0, 1.0, delta)
        h_r = (g - b) / safe_delta
        h_g = 2.0 + (b - r) / safe_delta
        h_b = 4.0 + (r - g) / safe_delta
        h = jnp.where(b == maxc, h_b, jnp.where(g == maxc, h_g, h_r))
        h = (h / 6.0) % 1.0
        h = jnp.where(delta == 0.0, 0.0, h)
        return jnp.stack([h, s, v], axis=-1)

    threshold = 1.732 * (1.0 - jax.nn.sigmoid(threshold_param))
    diff = jnp.linalg.norm(rgb2hsv(gt) - rgb2hsv(bg_map), axis=-1)
    return jnp.exp(-3.0 * (diff - threshold))


# ----------------------------- main -------------------------------------------


if __name__ == "__main__":
    key = jax.random.PRNGKey(0)
    k_gt, k_bg = jax.random.split(key)

    B, H, W = 2, 16, 16
    gt = jax.random.uniform(k_gt, (B, H, W, 3), dtype=jnp.float32)       # RGB in [0,1]
    bg_map = jax.random.uniform(k_bg, (B, H, W, 3), dtype=jnp.float32)

    # nn.Parameter(torch.tensor(-2.0)) -> deterministic scalar parameter.
    threshold_param = jnp.float32(-2.0)

    weights = bg_guided_sparsity_weights(gt, bg_map, threshold_param)
    weights = jax.block_until_ready(weights)

    ref = _reference(gt, bg_map, threshold_param)
    np.testing.assert_allclose(np.asarray(weights), np.asarray(ref),
                               rtol=1e-4, atol=1e-4)

    print("KERNEL_OK")
</pallas_src>

<mosaic_0001>
module attributes {stable_mosaic.version = 11 : i64} {
  func.func @bg_weights_kernel(%arg0: i32, %arg1: memref<1xf32, #tpu.memory_space<smem>>, %arg2: memref<384x384xbf16, #tpu.memory_space<vmem>>, %arg3: memref<4x384xf32, #tpu.memory_space<vmem>>, %arg4: memref<4x384xf32, #tpu.memory_space<vmem>>, %arg5: memref<4x128xf32, #tpu.memory_space<vmem>>) attributes {dimension_semantics = [#tpu.dimension_semantics<parallel>], iteration_bounds = array<i64: 1>, scalar_prefetch = 0 : i64, scratch_operands = 0 : i64, tpu.core_type = #tpu.core_type<tc>, window_params = [{transform_indices = @transform_0, window_bounds = array<i64: 1>}, {pipeline_mode = #tpu.pipeline_mode<synchronous>, transform_indices = @transform_1, window_bounds = array<i64: 384, 384>}, {transform_indices = @transform_2, window_bounds = array<i64: 4, 384>}, {transform_indices = @transform_3, window_bounds = array<i64: 4, 384>}, {transform_indices = @transform_4, window_bounds = array<i64: 4, 128>}]} {
    %c0 = arith.constant 0 : index
    %0 = memref.load %arg1[%c0] : memref<1xf32, #tpu.memory_space<smem>>
    %c0_0 = arith.constant 0 : index
    %c0_1 = arith.constant 0 : index
    %1 = vector.load %arg2[%c0_0, %c0_1] : memref<384x384xbf16, #tpu.memory_space<vmem>>, vector<384x384xbf16>
    %c0_2 = arith.constant 0 : index
    %c0_3 = arith.constant 0 : index
    %2 = vector.load %arg3[%c0_2, %c0_3] : memref<4x384xf32, #tpu.memory_space<vmem>>, vector<4x384xf32>
    %3 = arith.truncf %2 : vector<4x384xf32> to vector<4x384xbf16>
    %4 = arith.extf %3 : vector<4x384xbf16> to vector<4x384xf32>
    %5 = arith.subf %2, %4 : vector<4x384xf32>
    %6 = arith.truncf %5 : vector<4x384xf32> to vector<4x384xbf16>
    %cst = arith.constant dense<0.000000e+00> : vector<4x384xf32>
    %7 = tpu.matmul %3, %1, %cst {dimension_numbers = #tpu.dot_dimension_numbers<[1], [0], [0], [1], [0, 0, 1, 1], [], []>} : vector<4x384xbf16>, vector<384x384xbf16>, vector<4x384xf32> -> vector<4x384xf32>
    %cst_4 = arith.constant dense<0.000000e+00> : vector<4x384xf32>
    %8 = tpu.matmul %6, %1, %cst_4 {dimension_numbers = #tpu.dot_dimension_numbers<[1], [0], [0], [1], [0, 0, 1, 1], [], []>} : vector<4x384xbf16>, vector<384x384xbf16>, vector<4x384xf32> -> vector<4x384xf32>
    %9 = arith.addf %7, %8 : vector<4x384xf32>
    %10 = vector.extract_strided_slice %9 {offsets = [0, 0], sizes = [4, 128], strides = [1, 1]} : vector<4x384xf32> to vector<4x128xf32>
    %11 = vector.extract_strided_slice %9 {offsets = [0, 128], sizes = [4, 128], strides = [1, 1]} : vector<4x384xf32> to vector<4x128xf32>
    %12 = vector.extract_strided_slice %9 {offsets = [0, 256], sizes = [4, 128], strides = [1, 1]} : vector<4x384xf32> to vector<4x128xf32>
    %c0_5 = arith.constant 0 : index
    %c0_6 = arith.constant 0 : index
    %13 = vector.load %arg4[%c0_5, %c0_6] : memref<4x384xf32, #tpu.memory_space<vmem>>, vector<4x384xf32>
    %14 = arith.truncf %13 : vector<4x384xf32> to vector<4x384xbf16>
    %15 = arith.extf %14 : vector<4x384xbf16> to vector<4x384xf32>
    %16 = arith.subf %13, %15 : vector<4x384xf32>
    %17 = arith.truncf %16 : vector<4x384xf32> to vector<4x384xbf16>
    %cst_7 = arith.constant dense<0.000000e+00> : vector<4x384xf32>
    %18 = tpu.matmul %14, %1, %cst_7 {dimension_numbers = #tpu.dot_dimension_numbers<[1], [0], [0], [1], [0, 0, 1, 1], [], []>} : vector<4x384xbf16>, vector<384x384xbf16>, vector<4x384xf32> -> vector<4x384xf32>
    %cst_8 = arith.constant dense<0.000000e+00> : vector<4x384xf32>
    %19 = tpu.matmul %17, %1, %cst_8 {dimension_numbers = #tpu.dot_dimension_numbers<[1], [0], [0], [1], [0, 0, 1, 1], [], []>} : vector<4x384xbf16>, vector<384x384xbf16>, vector<4x384xf32> -> vector<4x384xf32>
    %20 = arith.addf %18, %19 : vector<4x384xf32>
    %21 = vector.extract_strided_slice %20 {offsets = [0, 0], sizes = [4, 128], strides = [1, 1]} : vector<4x384xf32> to vector<4x128xf32>
    %22 = vector.extract_strided_slice %20 {offsets = [0, 128], sizes = [4, 128], strides = [1, 1]} : vector<4x384xf32> to vector<4x128xf32>
    %23 = vector.extract_strided_slice %20 {offsets = [0, 256], sizes = [4, 128], strides = [1, 1]} : vector<4x384xf32> to vector<4x128xf32>
    %24 = arith.maximumf %10, %11 : vector<4x128xf32>
    %25 = arith.maximumf %24, %12 : vector<4x128xf32>
    %26 = arith.minimumf %10, %11 : vector<4x128xf32>
    %27 = arith.minimumf %26, %12 : vector<4x128xf32>
    %28 = arith.subf %25, %27 : vector<4x128xf32>
    %cst_9 = arith.constant 0.000000e+00 : f32
    %29 = vector.broadcast %cst_9 : f32 to vector<4x128xf32>
    %30 = arith.cmpf oeq, %28, %29 : vector<4x128xf32>
    %cst_10 = arith.constant 0.000000e+00 : f32
    %31 = vector.broadcast %cst_10 : f32 to vector<4x128xf32>
    %32 = arith.cmpf oeq, %25, %31 : vector<4x128xf32>
    %cst_11 = arith.constant 1.000000e+00 : f32
    %33 = vector.broadcast %cst_11 : f32 to vector<4x128xf32>
    %34 = arith.select %32, %33, %25 : vector<4x128xi1>, vector<4x128xf32>
    %35 = tpu.reciprocal %34 {approx = true} : vector<4x128xf32> -> vector<4x128xf32>
    %36 = arith.mulf %34, %35 : vector<4x128xf32>
    %cst_12 = arith.constant 2.000000e+00 : f32
    %37 = vector.broadcast %cst_12 : f32 to vector<4x128xf32>
    %38 = arith.subf %37, %36 : vector<4x128xf32>
    %39 = arith.mulf %35, %38 : vector<4x128xf32>
    %40 = arith.mulf %28, %39 : vector<4x128xf32>
    %cst_13 = arith.constant 0.000000e+00 : f32
    %41 = vector.broadcast %cst_13 : f32 to vector<4x128xf32>
    %42 = arith.select %30, %41, %40 : vector<4x128xi1>, vector<4x128xf32>
    %cst_14 = arith.constant 1.000000e+00 : f32
    %43 = vector.broadcast %cst_14 : f32 to vector<4x128xf32>
    %44 = arith.select %30, %43, %28 : vector<4x128xi1>, vector<4x128xf32>
    %45 = tpu.reciprocal %44 {approx = true} : vector<4x128xf32> -> vector<4x128xf32>
    %46 = arith.mulf %44, %45 : vector<4x128xf32>
    %cst_15 = arith.constant 2.000000e+00 : f32
    %47 = vector.broadcast %cst_15 : f32 to vector<4x128xf32>
    %48 = arith.subf %47, %46 : vector<4x128xf32>
    %49 = arith.mulf %45, %48 : vector<4x128xf32>
    %50 = arith.subf %11, %12 : vector<4x128xf32>
    %51 = arith.mulf %50, %49 : vector<4x128xf32>
    %52 = arith.subf %12, %10 : vector<4x128xf32>
    %53 = arith.mulf %52, %49 : vector<4x128xf32>
    %cst_16 = arith.constant 2.000000e+00 : f32
    %54 = vector.broadcast %cst_16 : f32 to vector<4x128xf32>
    %55 = arith.addf %54, %53 : vector<4x128xf32>
    %56 = arith.subf %10, %11 : vector<4x128xf32>
    %57 = arith.mulf %56, %49 : vector<4x128xf32>
    %cst_17 = arith.constant 4.000000e+00 : f32
    %58 = vector.broadcast %cst_17 : f32 to vector<4x128xf32>
    %59 = arith.addf %58, %57 : vector<4x128xf32>
    %60 = arith.cmpf oeq, %12, %25 : vector<4x128xf32>
    %61 = arith.cmpf oeq, %11, %25 : vector<4x128xf32>
    %62 = arith.select %61, %55, %51 : vector<4x128xi1>, vector<4x128xf32>
    %63 = arith.select %60, %59, %62 : vector<4x128xi1>, vector<4x128xf32>
    %cst_18 = arith.constant 0.166666672 : f32
    %64 = vector.broadcast %cst_18 : f32 to vector<4x128xf32>
    %65 = arith.mulf %63, %64 : vector<4x128xf32>
    %66 = math.floor %65 : vector<4x128xf32>
    %67 = arith.subf %65, %66 : vector<4x128xf32>
    %cst_19 = arith.constant 0.000000e+00 : f32
    %68 = vector.broadcast %cst_19 : f32 to vector<4x128xf32>
    %69 = arith.select %30, %68, %67 : vector<4x128xi1>, vector<4x128xf32>
    %70 = arith.maximumf %21, %22 : vector<4x128xf32>
    %71 = arith.maximumf %70, %23 : vector<4x128xf32>
    %72 = arith.minimumf %21, %22 : vector<4x128xf32>
    %73 = arith.minimumf %72, %23 : vector<4x128xf32>
    %74 = arith.subf %71, %73 : vector<4x128xf32>
    %cst_20 = arith.constant 0.000000e+00 : f32
    %75 = vector.broadcast %cst_20 : f32 to vector<4x128xf32>
    %76 = arith.cmpf oeq, %74, %75 : vector<4x128xf32>
    %cst_21 = arith.constant 0.000000e+00 : f32
    %77 = vector.broadcast %cst_21 : f32 to vector<4x128xf32>
    %78 = arith.cmpf oeq, %71, %77 : vector<4x128xf32>
    %cst_22 = arith.constant 1.000000e+00 : f32
    %79 = vector.broadcast %cst_22 : f32 to vector<4x128xf32>
    %80 = arith.select %78, %79, %71 : vector<4x128xi1>, vector<4x128xf32>
    %81 = tpu.reciprocal %80 {approx = true} : vector<4x128xf32> -> vector<4x128xf32>
    %82 = arith.mulf %80, %81 : vector<4x128xf32>
    %cst_23 = arith.constant 2.000000e+00 : f32
    %83 = vector.broadcast %cst_23 : f32 to vector<4x128xf32>
    %84 = arith.subf %83, %82 : vector<4x128xf32>
    %85 = arith.mulf %81, %84 : vector<4x128xf32>
    %86 = arith.mulf %74, %85 : vector<4x128xf32>
    %cst_24 = arith.constant 0.000000e+00 : f32
    %87 = vector.broadcast %cst_24 : f32 to vector<4x128xf32>
    %88 = arith.select %76, %87, %86 : vector<4x128xi1>, vector<4x128xf32>
    %cst_25 = arith.constant 1.000000e+00 : f32
    %89 = vector.broadcast %cst_25 : f32 to vector<4x128xf32>
    %90 = arith.select %76, %89, %74 : vector<4x128xi1>, vector<4x128xf32>
    %91 = tpu.reciprocal %90 {approx = true} : vector<4x128xf32> -> vector<4x128xf32>
    %92 = arith.mulf %90, %91 : vector<4x128xf32>
    %cst_26 = arith.constant 2.000000e+00 : f32
    %93 = vector.broadcast %cst_26 : f32 to vector<4x128xf32>
    %94 = arith.subf %93, %92 : vector<4x128xf32>
    %95 = arith.mulf %91, %94 : vector<4x128xf32>
    %96 = arith.subf %22, %23 : vector<4x128xf32>
    %97 = arith.mulf %96, %95 : vector<4x128xf32>
    %98 = arith.subf %23, %21 : vector<4x128xf32>
    %99 = arith.mulf %98, %95 : vector<4x128xf32>
    %cst_27 = arith.constant 2.000000e+00 : f32
    %100 = vector.broadcast %cst_27 : f32 to vector<4x128xf32>
    %101 = arith.addf %100, %99 : vector<4x128xf32>
    %102 = arith.subf %21, %22 : vector<4x128xf32>
    %103 = arith.mulf %102, %95 : vector<4x128xf32>
    %cst_28 = arith.constant 4.000000e+00 : f32
    %104 = vector.broadcast %cst_28 : f32 to vector<4x128xf32>
    %105 = arith.addf %104, %103 : vector<4x128xf32>
    %106 = arith.cmpf oeq, %23, %71 : vector<4x128xf32>
    %107 = arith.cmpf oeq, %22, %71 : vector<4x128xf32>
    %108 = arith.select %107, %101, %97 : vector<4x128xi1>, vector<4x128xf32>
    %109 = arith.select %106, %105, %108 : vector<4x128xi1>, vector<4x128xf32>
    %cst_29 = arith.constant 0.166666672 : f32
    %110 = vector.broadcast %cst_29 : f32 to vector<4x128xf32>
    %111 = arith.mulf %109, %110 : vector<4x128xf32>
    %112 = math.floor %111 : vector<4x128xf32>
    %113 = arith.subf %111, %112 : vector<4x128xf32>
    %cst_30 = arith.constant 0.000000e+00 : f32
    %114 = vector.broadcast %cst_30 : f32 to vector<4x128xf32>
    %115 = arith.select %76, %114, %113 : vector<4x128xi1>, vector<4x128xf32>
    %116 = arith.subf %69, %115 : vector<4x128xf32>
    %117 = arith.subf %42, %88 : vector<4x128xf32>
    %118 = arith.subf %25, %71 : vector<4x128xf32>
    %119 = arith.mulf %116, %116 : vector<4x128xf32>
    %120 = arith.mulf %117, %117 : vector<4x128xf32>
    %121 = arith.addf %119, %120 : vector<4x128xf32>
    %122 = arith.mulf %118, %118 : vector<4x128xf32>
    %123 = arith.addf %121, %122 : vector<4x128xf32>
    %124 = math.sqrt %123 : vector<4x128xf32>
    %cst_31 = arith.constant -3.000000e+00 : f32
    %125 = vector.broadcast %cst_31 : f32 to vector<4x128xf32>
    %126 = arith.mulf %125, %124 : vector<4x128xf32>
    %127 = math.exp %126 : vector<4x128xf32>
    %128 = vector.broadcast %0 : f32 to vector<4x128xf32>
    %129 = arith.mulf %128, %127 : vector<4x128xf32>
    %c0_32 = arith.constant 0 : index
    %c0_33 = arith.constant 0 : index
    %130 = vector.load %arg5[%c0_32, %c0_33] : memref<4x128xf32, #tpu.memory_space<vmem>>, vector<4x128xf32>
    tpu.vector_store %arg5[%c0_32, %c0_33], %129 {strides = array<i32>} : memref<4x128xf32, #tpu.memory_space<vmem>>, vector<4x128xf32>,
    return
  }
  func.func @transform_0(%arg0: i32) -> i32 {
    %c0_i32 = arith.constant 0 : i32
    %c0_i32_0 = arith.constant 0 : i32
    return %c0_i32 : i32
  }
  func.func @transform_1(%arg0: i32) -> (i32, i32) {
    %c0_i32 = arith.constant 0 : i32
    %c0_i32_0 = arith.constant 0 : i32
    %c0_i32_1 = arith.constant 0 : i32
    return %c0_i32, %c0_i32_0 : i32, i32
  }
  func.func @transform_2(%arg0: i32) -> (i32, i32) {
    %c0_i32 = arith.constant 0 : i32
    %c0_i32_0 = arith.constant 0 : i32
    return %arg0, %c0_i32 : i32, i32
  }
  func.func @transform_3(%arg0: i32) -> (i32, i32) {
    %c0_i32 = arith.constant 0 : i32
    %c0_i32_0 = arith.constant 0 : i32
    return %arg0, %c0_i32 : i32, i32
  }
  func.func @transform_4(%arg0: i32) -> (i32, i32) {
    %c0_i32 = arith.constant 0 : i32
    %c0_i32_0 = arith.constant 0 : i32
    return %arg0, %c0_i32 : i32, i32
  }
}

</mosaic_0001>

<llo_original>
// kernel: bg_guided_sparsity_weights.1
$region0: #{bg_guided_sparsity_weights.1}
  #allocation0 [shape = 'u32[]', space=smem, size = 0x4, offset = 0x4, fixed_abs, tag = 'smem constant byte address 0x4 - core index']
  #allocation1 [shape = 'u32[144,128]{1,0:T(1,128)}', space=vmem, size = 0x12000, scoped, tag = 'internal scratch']
  #allocation2 [shape = 'f32[1]{0:T(128)S(6)}', space=smem, size = 0x200, scoped, tag = 'scoped memory for bg_guided_sparsity_weights.1']
  %s0 = inlined_call_operand.<no memory space> [shape: f32[1], index: 0, kind: input, shape index: {}]
  %s1 = inlined_call_operand.vmem [shape: bf16[384,384], index: 1, kind: input, shape index: {}]
  %s2 = inlined_call_operand.vmem [shape: f32[4,384], index: 2, kind: input, shape index: {}]
  %s3 = inlined_call_operand.vmem [shape: f32[4,384], index: 3, kind: input, shape index: {}]
  %s4 = inlined_call_operand.vmem [shape: f32[4,128], index: 4, kind: output, shape index: {}]
  %s5 = sld [smem:[#allocation0]]
  $region26: #{bg_guided_sparsity_weights.1} parent=0
    _
  %s7 = ssub.s32 1, %s5
  %s8 = scalar_select 0, %s7, %s5
  %9 = sst [smem:[#allocation2]] %s0
  // Predicated region
  $region2: #{bg_guided_sparsity_weights.1} parent=0 // pred_check
    _
  $region3: #{bg_guided_sparsity_weights.1} parent=0 // pred_check_branch
    %11 = sbr.rel (0) target = $region5
  $region4: #{bg_guided_sparsity_weights.1} parent=0 // pred_region
    _
  $region5: #{bg_guided_sparsity_weights.1} parent=0 // pred_fallthru
    _
  // Predicated region
  $region6: #{bg_guided_sparsity_weights.1} parent=0 // pred_check
    _
  $region7: #{bg_guided_sparsity_weights.1} parent=0 // pred_check_branch
    %13 = sbr.rel (0) target = $region9
  $region8: #{bg_guided_sparsity_weights.1} parent=0 // pred_region
    _
  $region9: #{bg_guided_sparsity_weights.1} parent=0 // pred_fallthru
    _
  // Predicated region
  $region10: #{bg_guided_sparsity_weights.1} parent=0 // pred_check
    _
  $region11: #{bg_guided_sparsity_weights.1} parent=0 // pred_check_branch
    %15 = sbr.rel (0) target = $region13
  $region12: #{bg_guided_sparsity_weights.1} parent=0 // pred_region
    _
  $region13: #{bg_guided_sparsity_weights.1} parent=0 // pred_fallthru
    _
  // Predicated region
  $region14: #{bg_guided_sparsity_weights.1} parent=0 // pred_check
    _
  $region15: #{bg_guided_sparsity_weights.1} parent=0 // pred_check_branch
    %17 = sbr.rel (0) target = $region17
  $region16: #{bg_guided_sparsity_weights.1} parent=0 // pred_region
    _
  $region17: #{bg_guided_sparsity_weights.1} parent=0 // pred_fallthru
    _
  %s19 = sld [smem:[#allocation2]]
  %v20 = vld [vmem:[%s1] sm:$0xff]
  %v21 = vld [vmem:[%s1 + $0x8] sm:$0xf]
  %v22 = vld [vmem:[%s1 + $0xc] sm:$0xff]
  %v23 = vld [vmem:[%s1 + $0x14] sm:$0xf]
  %v24 = vld [vmem:[%s1 + $0x18] sm:$0xff]
  %v25 = vld [vmem:[%s1 + $0x20] sm:$0xf]
  %v26 = vld [vmem:[%s1 + $0x24] sm:$0xff]
  %v27 = vld [vmem:[%s1 + $0x2c] sm:$0xf]
  %v28 = vld [vmem:[%s1 + $0x30] sm:$0xff]
  %v29 = vld [vmem:[%s1 + $0x38] sm:$0xf]
  %v30 = vld [vmem:[%s1 + $0x3c] sm:$0xff]
  %v31 = vld [vmem:[%s1 + $0x44] sm:$0xf]
  %v32 = vld [vmem:[%s1 + $0x48] sm:$0xff]
  %v33 = vld [vmem:[%s1 + $0x50] sm:$0xf]
  %v34 = vld [vmem:[%s1 + $0x54] sm:$0xff]
  %v35 = vld [vmem:[%s1 + $0x5c] sm:$0xf]
  %v36 = vld [vmem:[%s1 + $0x60] sm:$0xff]
  %v37 = vld [vmem:[%s1 + $0x68] sm:$0xf]
  %v38 = vld [vmem:[%s1 + $0x6c] sm:$0xff]
  %v39 = vld [vmem:[%s1 + $0x74] sm:$0xf]
  %v40 = vld [vmem:[%s1 + $0x78] sm:$0xff]
  %v41 = vld [vmem:[%s1 + $0x80] sm:$0xf]
  %v42 = vld [vmem:[%s1 + $0x84] sm:$0xff]
  %v43 = vld [vmem:[%s1 + $0x8c] sm:$0xf]
  %v44 = vld [vmem:[%s1 + $0x90] sm:$0xff]
  %v45 = vld [vmem:[%s1 + $0x98] sm:$0xf]
  %v46 = vld [vmem:[%s1 + $0x9c] sm:$0xff]
  %v47 = vld [vmem:[%s1 + $0xa4] sm:$0xf]
  %v48 = vld [vmem:[%s1 + $0xa8] sm:$0xff]
  %v49 = vld [vmem:[%s1 + $0xb0] sm:$0xf]
  %v50 = vld [vmem:[%s1 + $0xb4] sm:$0xff]
  %v51 = vld [vmem:[%s1 + $0xbc] sm:$0xf]
  %v52 = vld [vmem:[%s1 + $0xc0] sm:$0xff]
  %v53 = vld [vmem:[%s1 + $0xc8] sm:$0xf]
  %v54 = vld [vmem:[%s1 + $0xcc] sm:$0xff]
  %v55 = vld [vmem:[%s1 + $0xd4] sm:$0xf]
  %v56 = vld [vmem:[%s1 + $0xd8] sm:$0xff]
  %v57 = vld [vmem:[%s1 + $0xe0] sm:$0xf]
  %v58 = vld [vmem:[%s1 + $0xe4] sm:$0xff]
  %v59 = vld [vmem:[%s1 + $0xec] sm:$0xf]
  %v60 = vld [vmem:[%s1 + $0xf0] sm:$0xff]
  %v61 = vld [vmem:[%s1 + $0xf8] sm:$0xf]
  %v62 = vld [vmem:[%s1 + $0xfc] sm:$0xff]
  %v63 = vld [vmem:[%s1 + $0x104] sm:$0xf]
  %v64 = vld [vmem:[%s1 + $0x108] sm:$0xff]
  %v65 = vld [vmem:[%s1 + $0x110] sm:$0xf]
  %v66 = vld [vmem:[%s1 + $0x114] sm:$0xff]
  %v67 = vld [vmem:[%s1 + $0x11c] sm:$0xf]
  %v68 = vld [vmem:[%s1 + $0x120] sm:$0xff]
  %v69 = vld [vmem:[%s1 + $0x128] sm:$0xf]
  %v70 = vld [vmem:[%s1 + $0x12c] sm:$0xff]
  %v71 = vld [vmem:[%s1 + $0x134] sm:$0xf]
  %v72 = vld [vmem:[%s1 + $0x138] sm:$0xff]
  %v73 = vld [vmem:[%s1 + $0x140] sm:$0xf]
  %v74 = vld [vmem:[%s1 + $0x144] sm:$0xff]
  %v75 = vld [vmem:[%s1 + $0x14c] sm:$0xf]
  %v76 = vld [vmem:[%s1 + $0x150] sm:$0xff]
  %v77 = vld [vmem:[%s1 + $0x158] sm:$0xf]
  %v78 = vld [vmem:[%s1 + $0x15c] sm:$0xff]
  %v79 = vld [vmem:[%s1 + $0x164] sm:$0xf]
  %v80 = vld [vmem:[%s1 + $0x168] sm:$0xff]
  %v81 = vld [vmem:[%s1 + $0x170] sm:$0xf]
  %v82 = vld [vmem:[%s1 + $0x174] sm:$0xff]
  %v83 = vld [vmem:[%s1 + $0x17c] sm:$0xf]
  %v84 = vld [vmem:[%s1 + $0x180] sm:$0xff]
  %v85 = vld [vmem:[%s1 + $0x188] sm:$0xf]
  %v86 = vld [vmem:[%s1 + $0x18c] sm:$0xff]
  %v87 = vld [vmem:[%s1 + $0x194] sm:$0xf]
  %v88 = vld [vmem:[%s1 + $0x198] sm:$0xff]
  %v89 = vld [vmem:[%s1 + $0x1a0] sm:$0xf]
  %v90 = vld [vmem:[%s1 + $0x1a4] sm:$0xff]
  %v91 = vld [vmem:[%s1 + $0x1ac] sm:$0xf]
  %v92 = vld [vmem:[%s1 + $0x1b0] sm:$0xff]
  %v93 = vld [vmem:[%s1 + $0x1b8] sm:$0xf]
  %v94 = vld [vmem:[%s1 + $0x1bc] sm:$0xff]
  %v95 = vld [vmem:[%s1 + $0x1c4] sm:$0xf]
  %v96 = vld [vmem:[%s1 + $0x1c8] sm:$0xff]
  %v97 = vld [vmem:[%s1 + $0x1d0] sm:$0xf]
  %v98 = vld [vmem:[%s1 + $0x1d4] sm:$0xff]
  %v99 = vld [vmem:[%s1 + $0x1dc] sm:$0xf]
  %v100 = vld [vmem:[%s1 + $0x1e0] sm:$0xff]
  %v101 = vld [vmem:[%s1 + $0x1e8] sm:$0xf]
  %v102 = vld [vmem:[%s1 + $0x1ec] sm:$0xff]
  %v103 = vld [vmem:[%s1 + $0x1f4] sm:$0xf]
  %v104 = vld [vmem:[%s1 + $0x1f8] sm:$0xff]
  %v105 = vld [vmem:[%s1 + $0x200] sm:$0xf]
  %v106 = vld [vmem:[%s1 + $0x204] sm:$0xff]
  %v107 = vld [vmem:[%s1 + $0x20c] sm:$0xf]
  %v108 = vld [vmem:[%s1 + $0x210] sm:$0xff]
  %v109 = vld [vmem:[%s1 + $0x218] sm:$0xf]
  %v110 = vld [vmem:[%s1 + $0x21c] sm:$0xff]
  %v111 = vld [vmem:[%s1 + $0x224] sm:$0xf]
  %v112 = vld [vmem:[%s1 + $0x228] sm:$0xff]
  %v113 = vld [vmem:[%s1 + $0x230] sm:$0xf]
  %v114 = vld [vmem:[%s1 + $0x234] sm:$0xff]
  %v115 = vld [vmem:[%s1 + $0x23c] sm:$0xf]
  %v116 = vld [vmem:[%s2] sm:$0xff]
  %v117 = vld [vmem:[%s2 + $0x8] sm:$0xf]
  %v119 = vcombine.high %v116, %v116
  %v121 = vpack.c.bf16 %v116, %v116
  %v122 = vpack.c.bf16 %v119, %v119
  %v123 = vpack.c.bf16 %v117, %v117
  %v124 = vunpack.c.l.bf16 %v121
  %v125 = vunpack.c.l.bf16 %v122
  %v126 = vunpack.c.l.bf16 %v123
  %v129 = vcombine.low %v124, %v125
  %v131 = vsub.f32 %v116, %v129
  %v132 = vsub.f32 %v117, %v126
  %v134 = vcombine.high %v131, %v131
  %v136 = vpack.c.bf16 %v131, %v131
  %v137 = vpack.c.bf16 %v134, %v134
  %v138 = vpack.c.bf16 %v132, %v132
  %v235 = vunpack.c.l.b16 %v20
  %v236 = vunpack.c.h.b16 %v20
  %v237 = vunpack.c.l.b16 %v21
  %v238 = vunpack.c.l.b16 %v22
  %v239 = vunpack.c.h.b16 %v22
  %v240 = vunpack.c.l.b16 %v23
  %v241 = vunpack.c.l.b16 %v24
  %v242 = vunpack.c.h.b16 %v24
  %v243 = vunpack.c.l.b16 %v25
  %v244 = vunpack.c.l.b16 %v26
  %v245 = vunpack.c.h.b16 %v26
  %v246 = vunpack.c.l.b16 %v27
  %v247 = vunpack.c.l.b16 %v28
  %v248 = vunpack.c.h.b16 %v28
  %v249 = vunpack.c.l.b16 %v29
  %v250 = vunpack.c.l.b16 %v30
  %v251 = vunpack.c.h.b16 %v30
  %v252 = vunpack.c.l.b16 %v31
  %v253 = vunpack.c.l.b16 %v32
  %v254 = vunpack.c.h.b16 %v32
  %v255 = vunpack.c.l.b16 %v33
  %v256 = vunpack.c.l.b16 %v34
  %v257 = vunpack.c.h.b16 %v34
  %v258 = vunpack.c.l.b16 %v35
  %v259 = vunpack.c.l.b16 %v36
  %v260 = vunpack.c.h.b16 %v36
  %v261 = vunpack.c.l.b16 %v37
  %v262 = vunpack.c.l.b16 %v38
  %v263 = vunpack.c.h.b16 %v38
  %v264 = vunpack.c.l.b16 %v39
  %v265 = vunpack.c.l.b16 %v40
  %v266 = vunpack.c.h.b16 %v40
  %v267 = vunpack.c.l.b16 %v41
  %v268 = vunpack.c.l.b16 %v42
  %v269 = vunpack.c.h.b16 %v42
  %v270 = vunpack.c.l.b16 %v43
  %v271 = vunpack.c.l.b16 %v44
  %v272 = vunpack.c.h.b16 %v44
  %v273 = vunpack.c.l.b16 %v45
  %v274 = vunpack.c.l.b16 %v46
  %v275 = vunpack.c.h.b16 %v46
  %v276 = vunpack.c.l.b16 %v47
  %v277 = vunpack.c.l.b16 %v48
  %v278 = vunpack.c.h.b16 %v48
  %v279 = vunpack.c.l.b16 %v49
  %v280 = vunpack.c.l.b16 %v50
  %v281 = vunpack.c.h.b16 %v50
  %v282 = vunpack.c.l.b16 %v51
  %v283 = vunpack.c.l.b16 %v52
  %v284 = vunpack.c.h.b16 %v52
  %v285 = vunpack.c.l.b16 %v53
  %v286 = vunpack.c.l.b16 %v54
  %v287 = vunpack.c.h.b16 %v54
  %v288 = vunpack.c.l.b16 %v55
  %v289 = vunpack.c.l.b16 %v56
  %v290 = vunpack.c.h.b16 %v56
  %v291 = vunpack.c.l.b16 %v57
  %v292 = vunpack.c.l.b16 %v58
  %v293 = vunpack.c.h.b16 %v58
  %v294 = vunpack.c.l.b16 %v59
  %v295 = vunpack.c.l.b16 %v60
  %v296 = vunpack.c.h.b16 %v60
  %v297 = vunpack.c.l.b16 %v61
  %v298 = vunpack.c.l.b16 %v62
  %v299 = vunpack.c.h.b16 %v62
  %v300 = vunpack.c.l.b16 %v63
  %v301 = vunpack.c.l.b16 %v64
  %v302 = vunpack.c.h.b16 %v64
  %v303 = vunpack.c.l.b16 %v65
  %v304 = vunpack.c.l.b16 %v66
  %v305 = vunpack.c.h.b16 %v66
  %v306 = vunpack.c.l.b16 %v67
  %v307 = vunpack.c.l.b16 %v68
  %v308 = vunpack.c.h.b16 %v68
  %v309 = vunpack.c.l.b16 %v69
  %v310 = vunpack.c.l.b16 %v70
  %v311 = vunpack.c.h.b16 %v70
  %v312 = vunpack.c.l.b16 %v71
  %v313 = vunpack.c.l.b16 %v72
  %v314 = vunpack.c.h.b16 %v72
  %v315 = vunpack.c.l.b16 %v73
  %v316 = vunpack.c.l.b16 %v74
  %v317 = vunpack.c.h.b16 %v74
  %v318 = vunpack.c.l.b16 %v75
  %v319 = vunpack.c.l.b16 %v76
  %v320 = vunpack.c.h.b16 %v76
  %v321 = vunpack.c.l.b16 %v77
  %v322 = vunpack.c.l.b16 %v78
  %v323 = vunpack.c.h.b16 %v78
  %v324 = vunpack.c.l.b16 %v79
  %v325 = vunpack.c.l.b16 %v80
  %v326 = vunpack.c.h.b16 %v80
  %v327 = vunpack.c.l.b16 %v81
  %v328 = vunpack.c.l.b16 %v82
  %v329 = vunpack.c.h.b16 %v82
  %v330 = vunpack.c.l.b16 %v83
  %v331 = vunpack.c.l.b16 %v84
  %v332 = vunpack.c.h.b16 %v84
  %v333 = vunpack.c.l.b16 %v85
  %v334 = vunpack.c.l.b16 %v86
  %v335 = vunpack.c.h.b16 %v86
  %v336 = vunpack.c.l.b16 %v87
  %v337 = vunpack.c.l.b16 %v88
  %v338 = vunpack.c.h.b16 %v88
  %v339 = vunpack.c.l.b16 %v89
  %v340 = vunpack.c.l.b16 %v90
  %v341 = vunpack.c.h.b16 %v90
  %v342 = vunpack.c.l.b16 %v91
  %v343 = vunpack.c.l.b16 %v92
  %v344 = vunpack.c.h.b16 %v92
  %v345 = vunpack.c.l.b16 %v93
  %v346 = vunpack.c.l.b16 %v94
  %v347 = vunpack.c.h.b16 %v94
  %v348 = vunpack.c.l.b16 %v95
  %v349 = vunpack.c.l.b16 %v96
  %v350 = vunpack.c.h.b16 %v96
  %v351 = vunpack.c.l.b16 %v97
  %v352 = vunpack.c.l.b16 %v98
  %v353 = vunpack.c.h.b16 %v98
  %v354 = vunpack.c.l.b16 %v99
  %v355 = vunpack.c.l.b16 %v100
  %v356 = vunpack.c.h.b16 %v100
  %v357 = vunpack.c.l.b16 %v101
  %v358 = vunpack.c.l.b16 %v102
  %v359 = vunpack.c.h.b16 %v102
  %v360 = vunpack.c.l.b16 %v103
  %v361 = vunpack.c.l.b16 %v104
  %v362 = vunpack.c.h.b16 %v104
  %v363 = vunpack.c.l.b16 %v105
  %v364 = vunpack.c.l.b16 %v106
  %v365 = vunpack.c.h.b16 %v106
  %v366 = vunpack.c.l.b16 %v107
  %v367 = vunpack.c.l.b16 %v108
  %v368 = vunpack.c.h.b16 %v108
  %v369 = vunpack.c.l.b16 %v109
  %v370 = vunpack.c.l.b16 %v110
  %v371 = vunpack.c.h.b16 %v110
  %v372 = vunpack.c.l.b16 %v111
  %v373 = vunpack.c.l.b16 %v112
  %v374 = vunpack.c.h.b16 %v112
  %v375 = vunpack.c.l.b16 %v113
  %v376 = vunpack.c.l.b16 %v114
  %v377 = vunpack.c.h.b16 %v114
  %v378 = vunpack.c.l.b16 %v115
  %v379 = vpack.c.b16 %v238, %v235
  %v380 = vpack.c.b16 %v239, %v236
  %v381 = vpack.c.b16 %v240, %v237
  %v382 = vpack.c.b16 %v244, %v241
  %v383 = vpack.c.b16 %v245, %v242
  %v384 = vpack.c.b16 %v246, %v243
  %v385 = vpack.c.b16 %v250, %v247
  %v386 = vpack.c.b16 %v251, %v248
  %v387 = vpack.c.b16 %v252, %v249
  %v388 = vpack.c.b16 %v256, %v253
  %v389 = vpack.c.b16 %v257, %v254
  %v390 = vpack.c.b16 %v258, %v255
  %v391 = vpack.c.b16 %v262, %v259
  %v392 = vpack.c.b16 %v263, %v260
  %v393 = vpack.c.b16 %v264, %v261
  %v394 = vpack.c.b16 %v268, %v265
  %v395 = vpack.c.b16 %v269, %v266
  %v396 = vpack.c.b16 %v270, %v267
  %v397 = vpack.c.b16 %v274, %v271
  %v398 = vpack.c.b16 %v275, %v272
  %v399 = vpack.c.b16 %v276, %v273
  %v400 = vpack.c.b16 %v280, %v277
  %v401 = vpack.c.b16 %v281, %v278
  %v402 = vpack.c.b16 %v282, %v279
  %v403 = vpack.c.b16 %v286, %v283
  %v404 = vpack.c.b16 %v287, %v284
  %v405 = vpack.c.b16 %v288, %v285
  %v406 = vpack.c.b16 %v292, %v289
  %v407 = vpack.c.b16 %v293, %v290
  %v408 = vpack.c.b16 %v294, %v291
  %v409 = vpack.c.b16 %v298, %v295
  %v410 = vpack.c.b16 %v299, %v296
  %v411 = vpack.c.b16 %v300, %v297
  %v412 = vpack.c.b16 %v304, %v301
  %v413 = vpack.c.b16 %v305, %v302
  %v414 = vpack.c.b16 %v306, %v303
  %v415 = vpack.c.b16 %v310, %v307
  %v416 = vpack.c.b16 %v311, %v308
  %v417 = vpack.c.b16 %v312, %v309
  %v418 = vpack.c.b16 %v316, %v313
  %v419 = vpack.c.b16 %v317, %v314
  %v420 = vpack.c.b16 %v318, %v315
  %v421 = vpack.c.b16 %v322, %v319
  %v422 = vpack.c.b16 %v323, %v320
  %v423 = vpack.c.b16 %v324, %v321
  %v424 = vpack.c.b16 %v328, %v325
  %v425 = vpack.c.b16 %v329, %v326
  %v426 = vpack.c.b16 %v330, %v327
  %v427 = vpack.c.b16 %v334, %v331
  %v428 = vpack.c.b16 %v335, %v332
  %v429 = vpack.c.b16 %v336, %v333
  %v430 = vpack.c.b16 %v340, %v337
  %v431 = vpack.c.b16 %v341, %v338
  %v432 = vpack.c.b16 %v342, %v339
  %v433 = vpack.c.b16 %v346, %v343
  %v434 = vpack.c.b16 %v347, %v344
  %v435 = vpack.c.b16 %v348, %v345
  %v436 = vpack.c.b16 %v352, %v349
  %v437 = vpack.c.b16 %v353, %v350
  %v438 = vpack.c.b16 %v354, %v351
  %v439 = vpack.c.b16 %v358, %v355
  %v440 = vpack.c.b16 %v359, %v356
  %v441 = vpack.c.b16 %v360, %v357
  %v442 = vpack.c.b16 %v364, %v361
  %v443 = vpack.c.b16 %v365, %v362
  %v444 = vpack.c.b16 %v366, %v363
  %v445 = vpack.c.b16 %v370, %v367
  %v446 = vpack.c.b16 %v371, %v368
  %v447 = vpack.c.b16 %v372, %v369
  %v448 = vpack.c.b16 %v376, %v373
  %v449 = vpack.c.b16 %v377, %v374
  %v450 = vpack.c.b16 %v378, %v375
  %523 = vmatprep.subr.bf16.mxu0 %v401
  %524 = vmatpush1.bf16.msra.mxu0 %v400
  %525 = vmatprep.subr.bf16.mxu0 %v398
  %526 = vmatpush1.bf16.msra.mxu0 %v397
  %527 = vmatprep.subr.bf16.mxu0 %v395
  %528 = vmatpush1.bf16.msra.mxu0 %v394
  %529 = vmatprep.subr.bf16.mxu0 %v392
  %530 = vmatpush1.bf16.msra.mxu0 %v391
  %531 = vmatprep.subr.bf16.mxu0 %v389
  %532 = vmatpush1.bf16.msra.mxu0 %v388
  %533 = vmatprep.subr.bf16.mxu0 %v386
  %534 = vmatpush1.bf16.msra.mxu0 %v385
  %535 = vmatprep.subr.bf16.mxu0 %v383
  %536 = vmatpush1.bf16.msra.mxu0 %v382
  %537 = vmatprep.subr.bf16.mxu0 %v380
  %538 = vmatpush1.bf16.msra.mxu0 %v379
  %539 = vmatprep.subr.bf16.mxu0 %v425
  %540 = vmatpush2.bf16.msra.mxu0 %v424
  %541 = vmatprep.subr.bf16.mxu0 %v422
  %542 = vmatpush2.bf16.msra.mxu0 %v421
  %543 = vmatprep.subr.bf16.mxu0 %v419
  %544 = vmatpush2.bf16.msra.mxu0 %v418
  %545 = vmatprep.subr.bf16.mxu0 %v416
  %546 = vmatpush2.bf16.msra.mxu0 %v415
  %547 = vmatprep.subr.bf16.mxu0 %v413
  %548 = vmatpush2.bf16.msra.mxu0 %v412
  %549 = vmatprep.subr.bf16.mxu0 %v410
  %550 = vmatpush2.bf16.msra.mxu0 %v409
  %551 = vmatprep.subr.bf16.mxu0 %v407
  %552 = vmatpush2.bf16.msra.mxu0 %v406
  %553 = vmatprep.subr.bf16.mxu0 %v404
  %554 = vmatpush2.bf16.msra.mxu0 %v403
  %555 = vmatprep.mubr.bf16.mxu0 %v137
  %556 = vmatmul.mubr.bf16.gmra.mxu0 %v136
  %v557 = vpop.f32.mrf.mxu0
  %v558 = vadd.f32 0.0, %v557
  %v559 = vpop.f32.mrf.mxu0
  %v560 = vadd.f32 0.0, %v559
  %v561 = vpop.f32.mrf.mxu0
  %v562 = vpop.f32.mrf.mxu0
  %563 = vdwg.mxu0
  %564 = vmatprep.subr.bf16.mxu0 %v449
  %565 = vmatpush1.bf16.msra.mxu0 %v448
  %566 = vmatprep.subr.bf16.mxu0 %v446
  %567 = vmatpush1.bf16.msra.mxu0 %v445
  %568 = vmatprep.subr.bf16.mxu0 %v443
  %569 = vmatpush1.bf16.msra.mxu0 %v442
  %570 = vmatprep.subr.bf16.mxu0 %v440
  %571 = vmatpush1.bf16.msra.mxu0 %v439
  %572 = vmatprep.subr.bf16.mxu0 %v437
  %573 = vmatpush1.bf16.msra.mxu0 %v436
  %574 = vmatprep.subr.bf16.mxu0 %v434
  %575 = vmatpush1.bf16.msra.mxu0 %v433
  %576 = vmatprep.subr.bf16.mxu0 %v431
  %577 = vmatpush1.bf16.msra.mxu0 %v430
  %578 = vmatprep.subr.bf16.mxu0 %v428
  %579 = vmatpush1.bf16.msra.mxu0 %v427
  %580 = vmatprep.subr.bf16.mxu0 0
  %581 = vmatpush2.bf16.msra.mxu0 0
  %582 = vmatprep.subr.bf16.mxu0 0
  %583 = vmatpush2.bf16.msra.mxu0 0
  %584 = vmatprep.subr.bf16.mxu0 0
  %585 = vmatpush2.bf16.msra.mxu0 0
  %586 = vmatprep.subr.bf16.mxu0 0
  %587 = vmatpush2.bf16.msra.mxu0 0
  %588 = vmatprep.subr.bf16.mxu0 0
  %589 = vmatpush2.bf16.msra.mxu0 0
  %590 = vmatprep.subr.bf16.mxu0 0
  %591 = vmatpush2.bf16.msra.mxu0 0
  %592 = vmatprep.subr.bf16.mxu0 0
  %593 = vmatpush2.bf16.msra.mxu0 0
  %594 = vmatprep.subr.bf16.mxu0 0
  %595 = vmatpush2.bf16.msra.mxu0 0
  %596 = vmatprep.mubr.bf16.mxu0 0
  %597 = vmatmul.mubr.bf16.gmra.mxu0 %v138
  %v598 = vpop.f32.mrf.mxu0
  %v599 = vadd.f32 %v558, %v598
  %v600 = vpop.f32.mrf.mxu0
  %v601 = vadd.f32 %v560, %v600
  %v602 = vpop.f32.mrf.mxu0
  %v603 = vpop.f32.mrf.mxu0
  %604 = vdwg.mxu0
  %605 = vmatprep.subr.bf16.mxu0 0
  %606 = vmatpush1.bf16.msra.mxu0 %v402
  %607 = vmatprep.subr.bf16.mxu0 0
  %608 = vmatpush1.bf16.msra.mxu0 %v399
  %609 = vmatprep.subr.bf16.mxu0 0
  %610 = vmatpush1.bf16.msra.mxu0 %v396
  %611 = vmatprep.subr.bf16.mxu0 0
  %612 = vmatpush1.bf16.msra.mxu0 %v393
  %613 = vmatprep.subr.bf16.mxu0 0
  %614 = vmatpush1.bf16.msra.mxu0 %v390
  %615 = vmatprep.subr.bf16.mxu0 0
  %616 = vmatpush1.bf16.msra.mxu0 %v387
  %617 = vmatprep.subr.bf16.mxu0 0
  %618 = vmatpush1.bf16.msra.mxu0 %v384
  %619 = vmatprep.subr.bf16.mxu0 0
  %620 = vmatpush1.bf16.msra.mxu0 %v381
  %621 = vmatprep.subr.bf16.mxu0 0
  %622 = vmatpush2.bf16.msra.mxu0 %v426
  %623 = vmatprep.subr.bf16.mxu0 0
  %624 = vmatpush2.bf16.msra.mxu0 %v423
  %625 = vmatprep.subr.bf16.mxu0 0
  %626 = vmatpush2.bf16.msra.mxu0 %v420
  %627 = vmatprep.subr.bf16.mxu0 0
  %628 = vmatpush2.bf16.msra.mxu0 %v417
  %629 = vmatprep.subr.bf16.mxu0 0
  %630 = vmatpush2.bf16.msra.mxu0 %v414
  %631 = vmatprep.subr.bf16.mxu0 0
  %632 = vmatpush2.bf16.msra.mxu0 %v411
  %633 = vmatprep.subr.bf16.mxu0 0
  %634 = vmatpush2.bf16.msra.mxu0 %v408
  %635 = vmatprep.subr.bf16.mxu0 0
  %636 = vmatpush2.bf16.msra.mxu0 %v405
  %637 = vmatprep.mubr.bf16.mxu0 %v137
  %638 = vmatmul.mubr.bf16.gmra.mxu0 %v136
  %v639 = vpop.f32.mrf.mxu0
  %v640 = vadd.f32 0.0, %v639
  %v641 = vpop.f32.mrf.mxu0
  %v642 = vpop.f32.mrf.mxu0
  %v643 = vpop.f32.mrf.mxu0
  %644 = vdwg.mxu0
  %645 = vmatprep.subr.bf16.mxu0 0
  %646 = vmatpush1.bf16.msra.mxu0 %v450
  %647 = vmatprep.subr.bf16.mxu0 0
  %648 = vmatpush1.bf16.msra.mxu0 %v447
  %649 = vmatprep.subr.bf16.mxu0 0
  %650 = vmatpush1.bf16.msra.mxu0 %v444
  %651 = vmatprep.subr.bf16.mxu0 0
  %652 = vmatpush1.bf16.msra.mxu0 %v441
  %653 = vmatprep.subr.bf16.mxu0 0
  %654 = vmatpush1.bf16.msra.mxu0 %v438
  %655 = vmatprep.subr.bf16.mxu0 0
  %656 = vmatpush1.bf16.msra.mxu0 %v435
  %657 = vmatprep.subr.bf16.mxu0 0
  %658 = vmatpush1.bf16.msra.mxu0 %v432
  %659 = vmatprep.subr.bf16.mxu0 0
  %660 = vmatpush1.bf16.msra.mxu0 %v429
  %661 = vmatprep.subr.bf16.mxu0 0
  %662 = vmatpush2.bf16.msra.mxu0 0
  %663 = vmatprep.subr.bf16.mxu0 0
  %664 = vmatpush2.bf16.msra.mxu0 0
  %665 = vmatprep.subr.bf16.mxu0 0
  %666 = vmatpush2.bf16.msra.mxu0 0
  %667 = vmatprep.subr.bf16.mxu0 0
  %668 = vmatpush2.bf16.msra.mxu0 0
  %669 = vmatprep.subr.bf16.mxu0 0
  %670 = vmatpush2.bf16.msra.mxu0 0
  %671 = vmatprep.subr.bf16.mxu0 0
  %672 = vmatpush2.bf16.msra.mxu0 0
  %673 = vmatprep.subr.bf16.mxu0 0
  %674 = vmatpush2.bf16.msra.mxu0 0
  %675 = vmatprep.subr.bf16.mxu0 0
  %676 = vmatpush2.bf16.msra.mxu0 0
  %677 = vmatprep.mubr.bf16.mxu0 0
  %678 = vmatmul.mubr.bf16.gmra.mxu0 %v138
  %v679 = vpop.f32.mrf.mxu0
  %v680 = vadd.f32 %v640, %v679
  %v681 = vpop.f32.mrf.mxu0
  %v682 = vpop.f32.mrf.mxu0
  %v683 = vpop.f32.mrf.mxu0
  %684 = vdwg.mxu0
  %685 = vmatprep.subr.bf16.mxu0 %v401
  %686 = vmatpush1.bf16.msra.mxu0 %v400
  %687 = vmatprep.subr.bf16.mxu0 %v398
  %688 = vmatpush1.bf16.msra.mxu0 %v397
  %689 = vmatprep.subr.bf16.mxu0 %v395
  %690 = vmatpush1.bf16.msra.mxu0 %v394
  %691 = vmatprep.subr.bf16.mxu0 %v392
  %692 = vmatpush1.bf16.msra.mxu0 %v391
  %693 = vmatprep.subr.bf16.mxu0 %v389
  %694 = vmatpush1.bf16.msra.mxu0 %v388
  %695 = vmatprep.subr.bf16.mxu0 %v386
  %696 = vmatpush1.bf16.msra.mxu0 %v385
  %697 = vmatprep.subr.bf16.mxu0 %v383
  %698 = vmatpush1.bf16.msra.mxu0 %v382
  %699 = vmatprep.subr.bf16.mxu0 %v380
  %700 = vmatpush1.bf16.msra.mxu0 %v379
  %701 = vmatprep.subr.bf16.mxu0 %v425
  %702 = vmatpush2.bf16.msra.mxu0 %v424
  %703 = vmatprep.subr.bf16.mxu0 %v422
  %704 = vmatpush2.bf16.msra.mxu0 %v421
  %705 = vmatprep.subr.bf16.mxu0 %v419
  %706 = vmatpush2.bf16.msra.mxu0 %v418
  %707 = vmatprep.subr.bf16.mxu0 %v416
  %708 = vmatpush2.bf16.msra.mxu0 %v415
  %709 = vmatprep.subr.bf16.mxu0 %v413
  %710 = vmatpush2.bf16.msra.mxu0 %v412
  %711 = vmatprep.subr.bf16.mxu0 %v410
  %712 = vmatpush2.bf16.msra.mxu0 %v409
  %713 = vmatprep.subr.bf16.mxu0 %v407
  %714 = vmatpush2.bf16.msra.mxu0 %v406
  %715 = vmatprep.subr.bf16.mxu0 %v404
  %716 = vmatpush2.bf16.msra.mxu0 %v403
  %717 = vmatprep.mubr.bf16.mxu0 %v122
  %718 = vmatmul.mubr.bf16.gmra.mxu0 %v121
  %v719 = vpop.f32.mrf.mxu0
  %v720 = vadd.f32 %v599, %v719
  %v721 = vpop.f32.mrf.mxu0
  %v722 = vadd.f32 %v601, %v721
  %v723 = vpop.f32.mrf.mxu0
  %v724 = vpop.f32.mrf.mxu0
  %725 = vdwg.mxu0
  %726 = vmatprep.subr.bf16.mxu0 %v449
  %727 = vmatpush1.bf16.msra.mxu0 %v448
  %728 = vmatprep.subr.bf16.mxu0 %v446
  %729 = vmatpush1.bf16.msra.mxu0 %v445
  %730 = vmatprep.subr.bf16.mxu0 %v443
  %731 = vmatpush1.bf16.msra.mxu0 %v442
  %732 = vmatprep.subr.bf16.mxu0 %v440
  %733 = vmatpush1.bf16.msra.mxu0 %v439
  %734 = vmatprep.subr.bf16.mxu0 %v437
  %735 = vmatpush1.bf16.msra.mxu0 %v436
  %736 = vmatprep.subr.bf16.mxu0 %v434
  %737 = vmatpush1.bf16.msra.mxu0 %v433
  %738 = vmatprep.subr.bf16.mxu0 %v431
  %739 = vmatpush1.bf16.msra.mxu0 %v430
  %740 = vmatprep.subr.bf16.mxu0 %v428
  %741 = vmatpush1.bf16.msra.mxu0 %v427
  %742 = vmatprep.subr.bf16.mxu0 0
  %743 = vmatpush2.bf16.msra.mxu0 0
  %744 = vmatprep.subr.bf16.mxu0 0
  %745 = vmatpush2.bf16.msra.mxu0 0
  %746 = vmatprep.subr.bf16.mxu0 0
  %747 = vmatpush2.bf16.msra.mxu0 0
  %748 = vmatprep.subr.bf16.mxu0 0
  %749 = vmatpush2.bf16.msra.mxu0 0
  %750 = vmatprep.subr.bf16.mxu0 0
  %751 = vmatpush2.bf16.msra.mxu0 0
  %752 = vmatprep.subr.bf16.mxu0 0
  %753 = vmatpush2.bf16.msra.mxu0 0
  %754 = vmatprep.subr.bf16.mxu0 0
  %755 = vmatpush2.bf16.msra.mxu0 0
  %756 = vmatprep.subr.bf16.mxu0 0
  %757 = vmatpush2.bf16.msra.mxu0 0
  %758 = vmatprep.mubr.bf16.mxu0 0
  %759 = vmatmul.mubr.bf16.gmra.mxu0 %v123
  %v760 = vpop.f32.mrf.mxu0
  %v761 = vadd.f32 %v720, %v760
  %v762 = vpop.f32.mrf.mxu0
  %v763 = vadd.f32 %v722, %v762
  %v764 = vpop.f32.mrf.mxu0
  %v765 = vpop.f32.mrf.mxu0
  %766 = vdwg.mxu0
  %767 = vmatprep.subr.bf16.mxu0 0
  %768 = vmatpush1.bf16.msra.mxu0 %v402
  %769 = vmatprep.subr.bf16.mxu0 0
  %770 = vmatpush1.bf16.msra.mxu0 %v399
  %771 = vmatprep.subr.bf16.mxu0 0
  %772 = vmatpush1.bf16.msra.mxu0 %v396
  %773 = vmatprep.subr.bf16.mxu0 0
  %774 = vmatpush1.bf16.msra.mxu0 %v393
  %775 = vmatprep.subr.bf16.mxu0 0
  %776 = vmatpush1.bf16.msra.mxu0 %v390
  %777 = vmatprep.subr.bf16.mxu0 0
  %778 = vmatpush1.bf16.msra.mxu0 %v387
  %779 = vmatprep.subr.bf16.mxu0 0
  %780 = vmatpush1.bf16.msra.mxu0 %v384
  %781 = vmatprep.subr.bf16.mxu0 0
  %782 = vmatpush1.bf16.msra.mxu0 %v381
  %783 = vmatprep.subr.bf16.mxu0 0
  %784 = vmatpush2.bf16.msra.mxu0 %v426
  %785 = vmatprep.subr.bf16.mxu0 0
  %786 = vmatpush2.bf16.msra.mxu0 %v423
  %787 = vmatprep.subr.bf16.mxu0 0
  %788 = vmatpush2.bf16.msra.mxu0 %v420
  %789 = vmatprep.subr.bf16.mxu0 0
  %790 = vmatpush2.bf16.msra.mxu0 %v417
  %791 = vmatprep.subr.bf16.mxu0 0
  %792 = vmatpush2.bf16.msra.mxu0 %v414
  %793 = vmatprep.subr.bf16.mxu0 0
  %794 = vmatpush2.bf16.msra.mxu0 %v411
  %795 = vmatprep.subr.bf16.mxu0 0
  %796 = vmatpush2.bf16.msra.mxu0 %v408
  %797 = vmatprep.subr.bf16.mxu0 0
  %798 = vmatpush2.bf16.msra.mxu0 %v405
  %799 = vmatprep.mubr.bf16.mxu0 %v122
  %800 = vmatmul.mubr.bf16.gmra.mxu0 %v121
  %v801 = vpop.f32.mrf.mxu0
  %v802 = vadd.f32 %v680, %v801
  %v803 = vpop.f32.mrf.mxu0
  %v804 = vpop.f32.mrf.mxu0
  %v805 = vpop.f32.mrf.mxu0
  %806 = vdwg.mxu0
  %807 = vmatprep.subr.bf16.mxu0 0
  %808 = vmatpush1.bf16.msra.mxu0 %v450
  %809 = vmatprep.subr.bf16.mxu0 0
  %810 = vmatpush1.bf16.msra.mxu0 %v447
  %811 = vmatprep.subr.bf16.mxu0 0
  %812 = vmatpush1.bf16.msra.mxu0 %v444
  %813 = vmatprep.subr.bf16.mxu0 0
  %814 = vmatpush1.bf16.msra.mxu0 %v441
  %815 = vmatprep.subr.bf16.mxu0 0
  %816 = vmatpush1.bf16.msra.mxu0 %v438
  %817 = vmatprep.subr.bf16.mxu0 0
  %818 = vmatpush1.bf16.msra.mxu0 %v435
  %819 = vmatprep.subr.bf16.mxu0 0
  %820 = vmatpush1.bf16.msra.mxu0 %v432
  %821 = vmatprep.subr.bf16.mxu0 0
  %822 = vmatpush1.bf16.msra.mxu0 %v429
  %823 = vmatprep.subr.bf16.mxu0 0
  %824 = vmatpush2.bf16.msra.mxu0 0
  %825 = vmatprep.subr.bf16.mxu0 0
  %826 = vmatpush2.bf16.msra.mxu0 0
  %827 = vmatprep.subr.bf16.mxu0 0
  %828 = vmatpush2.bf16.msra.mxu0 0
  %829 = vmatprep.subr.bf16.mxu0 0
  %830 = vmatpush2.bf16.msra.mxu0 0
  %831 = vmatprep.subr.bf16.mxu0 0
  %832 = vmatpush2.bf16.msra.mxu0 0
  %833 = vmatprep.subr.bf16.mxu0 0
  %834 = vmatpush2.bf16.msra.mxu0 0
  %835 = vmatprep.subr.bf16.mxu0 0
  %836 = vmatpush2.bf16.msra.mxu0 0
  %837 = vmatprep.subr.bf16.mxu0 0
  %838 = vmatpush2.bf16.msra.mxu0 0
  %839 = vmatprep.mubr.bf16.mxu0 0
  %840 = vmatmul.mubr.bf16.gmra.mxu0 %v123
  %v841 = vpop.f32.mrf.mxu0
  %v842 = vadd.f32 %v802, %v841
  %v843 = vpop.f32.mrf.mxu0
  %v844 = vpop.f32.mrf.mxu0
  %v845 = vpop.f32.mrf.mxu0
  %846 = vdwg.mxu0
  %v847 = vld [vmem:[%s3] sm:$0xff]
  %v848 = vld [vmem:[%s3 + $0x8] sm:$0xf]
  %v850 = vcombine.high %v847, %v847
  %v852 = vpack.c.bf16 %v847, %v847
  %v853 = vpack.c.bf16 %v850, %v850
  %v854 = vpack.c.bf16 %v848, %v848
  %v855 = vunpack.c.l.bf16 %v852
  %v856 = vunpack.c.l.bf16 %v853
  %v857 = vunpack.c.l.bf16 %v854
  %v860 = vcombine.low %v855, %v856
  %v862 = vsub.f32 %v847, %v860
  %v863 = vsub.f32 %v848, %v857
  %v865 = vcombine.high %v862, %v862
  %v867 = vpack.c.bf16 %v862, %v862
  %v868 = vpack.c.bf16 %v865, %v865
  %v869 = vpack.c.bf16 %v863, %v863
  %870 = vmatprep.subr.bf16.mxu0 %v401
  %871 = vmatpush1.bf16.msra.mxu0 %v400
  %872 = vmatprep.subr.bf16.mxu0 %v398
  %873 = vmatpush1.bf16.msra.mxu0 %v397
  %874 = vmatprep.subr.bf16.mxu0 %v395
  %875 = vmatpush1.bf16.msra.mxu0 %v394
  %876 = vmatprep.subr.bf16.mxu0 %v392
  %877 = vmatpush1.bf16.msra.mxu0 %v391
  %878 = vmatprep.subr.bf16.mxu0 %v389
  %879 = vmatpush1.bf16.msra.mxu0 %v388
  %880 = vmatprep.subr.bf16.mxu0 %v386
  %881 = vmatpush1.bf16.msra.mxu0 %v385
  %882 = vmatprep.subr.bf16.mxu0 %v383
  %883 = vmatpush1.bf16.msra.mxu0 %v382
  %884 = vmatprep.subr.bf16.mxu0 %v380
  %885 = vmatpush1.bf16.msra.mxu0 %v379
  %886 = vmatprep.subr.bf16.mxu0 %v425
  %887 = vmatpush2.bf16.msra.mxu0 %v424
  %888 = vmatprep.subr.bf16.mxu0 %v422
  %889 = vmatpush2.bf16.msra.mxu0 %v421
  %890 = vmatprep.subr.bf16.mxu0 %v419
  %891 = vmatpush2.bf16.msra.mxu0 %v418
  %892 = vmatprep.subr.bf16.mxu0 %v416
  %893 = vmatpush2.bf16.msra.mxu0 %v415
  %894 = vmatprep.subr.bf16.mxu0 %v413
  %895 = vmatpush2.bf16.msra.mxu0 %v412
  %896 = vmatprep.subr.bf16.mxu0 %v410
  %897 = vmatpush2.bf16.msra.mxu0 %v409
  %898 = vmatprep.subr.bf16.mxu0 %v407
  %899 = vmatpush2.bf16.msra.mxu0 %v406
  %900 = vmatprep.subr.bf16.mxu0 %v404
  %901 = vmatpush2.bf16.msra.mxu0 %v403
  %902 = vmatprep.mubr.bf16.mxu0 %v868
  %903 = vmatmul.mubr.bf16.gmra.mxu0 %v867
  %v904 = vpop.f32.mrf.mxu0
  %v905 = vadd.f32 0.0, %v904
  %v906 = vpop.f32.mrf.mxu0
  %v907 = vadd.f32 0.0, %v906
  %v908 = vpop.f32.mrf.mxu0
  %v909 = vpop.f32.mrf.mxu0
  %910 = vdwg.mxu0
  %911 = vmatprep.subr.bf16.mxu0 %v449
  %912 = vmatpush1.bf16.msra.mxu0 %v448
  %913 = vmatprep.subr.bf16.mxu0 %v446
  %914 = vmatpush1.bf16.msra.mxu0 %v445
  %915 = vmatprep.subr.bf16.mxu0 %v443
  %916 = vmatpush1.bf16.msra.mxu0 %v442
  %917 = vmatprep.subr.bf16.mxu0 %v440
  %918 = vmatpush1.bf16.msra.mxu0 %v439
  %919 = vmatprep.subr.bf16.mxu0 %v437
  %920 = vmatpush1.bf16.msra.mxu0 %v436
  %921 = vmatprep.subr.bf16.mxu0 %v434
  %922 = vmatpush1.bf16.msra.mxu0 %v433
  %923 = vmatprep.subr.bf16.mxu0 %v431
  %924 = vmatpush1.bf16.msra.mxu0 %v430
  %925 = vmatprep.subr.bf16.mxu0 %v428
  %926 = vmatpush1.bf16.msra.mxu0 %v427
  %927 = vmatprep.subr.bf16.mxu0 0
  %928 = vmatpush2.bf16.msra.mxu0 0
  %929 = vmatprep.subr.bf16.mxu0 0
  %930 = vmatpush2.bf16.msra.mxu0 0
  %931 = vmatprep.subr.bf16.mxu0 0
  %932 = vmatpush2.bf16.msra.mxu0 0
  %933 = vmatprep.subr.bf16.mxu0 0
  %934 = vmatpush2.bf16.msra.mxu0 0
  %935 = vmatprep.subr.bf16.mxu0 0
  %936 = vmatpush2.bf16.msra.mxu0 0
  %937 = vmatprep.subr.bf16.mxu0 0
  %938 = vmatpush2.bf16.msra.mxu0 0
  %939 = vmatprep.subr.bf16.mxu0 0
  %940 = vmatpush2.bf16.msra.mxu0 0
  %941 = vmatprep.subr.bf16.mxu0 0
  %942 = vmatpush2.bf16.msra.mxu0 0
  %943 = vmatprep.mubr.bf16.mxu0 0
  %944 = vmatmul.mubr.bf16.gmra.mxu0 %v869
  %v945 = vpop.f32.mrf.mxu0
  %v946 = vadd.f32 %v905, %v945
  %v947 = vpop.f32.mrf.mxu0
  %v948 = vadd.f32 %v907, %v947
  %v949 = vpop.f32.mrf.mxu0
  %v950 = vpop.f32.mrf.mxu0
  %951 = vdwg.mxu0
  %952 = vmatprep.subr.bf16.mxu0 0
  %953 = vmatpush1.bf16.msra.mxu0 %v402
  %954 = vmatprep.subr.bf16.mxu0 0
  %955 = vmatpush1.bf16.msra.mxu0 %v399
  %956 = vmatprep.subr.bf16.mxu0 0
  %957 = vmatpush1.bf16.msra.mxu0 %v396
  %958 = vmatprep.subr.bf16.mxu0 0
  %959 = vmatpush1.bf16.msra.mxu0 %v393
  %960 = vmatprep.subr.bf16.mxu0 0
  %961 = vmatpush1.bf16.msra.mxu0 %v390
  %962 = vmatprep.subr.bf16.mxu0 0
  %963 = vmatpush1.bf16.msra.mxu0 %v387
  %964 = vmatprep.subr.bf16.mxu0 0
  %965 = vmatpush1.bf16.msra.mxu0 %v384
  %966 = vmatprep.subr.bf16.mxu0 0
  %967 = vmatpush1.bf16.msra.mxu0 %v381
  %968 = vmatprep.subr.bf16.mxu0 0
  %969 = vmatpush2.bf16.msra.mxu0 %v426
  %970 = vmatprep.subr.bf16.mxu0 0
  %971 = vmatpush2.bf16.msra.mxu0 %v423
  %972 = vmatprep.subr.bf16.mxu0 0
  %973 = vmatpush2.bf16.msra.mxu0 %v420
  %974 = vmatprep.subr.bf16.mxu0 0
  %975 = vmatpush2.bf16.msra.mxu0 %v417
  %976 = vmatprep.subr.bf16.mxu0 0
  %977 = vmatpush2.bf16.msra.mxu0 %v414
  %978 = vmatprep.subr.bf16.mxu0 0
  %979 = vmatpush2.bf16.msra.mxu0 %v411
  %980 = vmatprep.subr.bf16.mxu0 0
  %981 = vmatpush2.bf16.msra.mxu0 %v408
  %982 = vmatprep.subr.bf16.mxu0 0
  %983 = vmatpush2.bf16.msra.mxu0 %v405
  %984 = vmatprep.mubr.bf16.mxu0 %v868
  %985 = vmatmul.mubr.bf16.gmra.mxu0 %v867
  %v986 = vpop.f32.mrf.mxu0
  %v987 = vadd.f32 0.0, %v986
  %v988 = vpop.f32.mrf.mxu0
  %v989 = vpop.f32.mrf.mxu0
  %v990 = vpop.f32.mrf.mxu0
  %991 = vdwg.mxu0
  %992 = vmatprep.subr.bf16.mxu0 0
  %993 = vmatpush1.bf16.msra.mxu0 %v450
  %994 = vmatprep.subr.bf16.mxu0 0
  %995 = vmatpush1.bf16.msra.mxu0 %v447
  %996 = vmatprep.subr.bf16.mxu0 0
  %997 = vmatpush1.bf16.msra.mxu0 %v444
  %998 = vmatprep.subr.bf16.mxu0 0
  %999 = vmatpush1.bf16.msra.mxu0 %v441
  %1000 = vmatprep.subr.bf16.mxu0 0
  %1001 = vmatpush1.bf16.msra.mxu0 %v438
  %1002 = vmatprep.subr.bf16.mxu0 0
  %1003 = vmatpush1.bf16.msra.mxu0 %v435
  %1004 = vmatprep.subr.bf16.mxu0 0
  %1005 = vmatpush1.bf16.msra.mxu0 %v432
  %1006 = vmatprep.subr.bf16.mxu0 0
  %1007 = vmatpush1.bf16.msra.mxu0 %v429
  %1008 = vmatprep.subr.bf16.mxu0 0
  %1009 = vmatpush2.bf16.msra.mxu0 0
  %1010 = vmatprep.subr.bf16.mxu0 0
  %1011 = vmatpush2.bf16.msra.mxu0 0
  %1012 = vmatprep.subr.bf16.mxu0 0
  %1013 = vmatpush2.bf16.msra.mxu0 0
  %1014 = vmatprep.subr.bf16.mxu0 0
  %1015 = vmatpush2.bf16.msra.mxu0 0
  %1016 = vmatprep.subr.bf16.mxu0 0
  %1017 = vmatpush2.bf16.msra.mxu0 0
  %1018 = vmatprep.subr.bf16.mxu0 0
  %1019 = vmatpush2.bf16.msra.mxu0 0
  %1020 = vmatprep.subr.bf16.mxu0 0
  %1021 = vmatpush2.bf16.msra.mxu0 0
  %1022 = vmatprep.subr.bf16.mxu0 0
  %1023 = vmatpush2.bf16.msra.mxu0 0
  %1024 = vmatprep.mubr.bf16.mxu0 0
  %1025 = vmatmul.mubr.bf16.gmra.mxu0 %v869
  %v1026 = vpop.f32.mrf.mxu0
  %v1027 = vadd.f32 %v987, %v1026
  %v1028 = vpop.f32.mrf.mxu0
  %v1029 = vpop.f32.mrf.mxu0
  %v1030 = vpop.f32.mrf.mxu0
  %1031 = vdwg.mxu0
  %1032 = vmatprep.subr.bf16.mxu0 %v401
  %1033 = vmatpush1.bf16.msra.mxu0 %v400
  %1034 = vmatprep.subr.bf16.mxu0 %v398
  %1035 = vmatpush1.bf16.msra.mxu0 %v397
  %1036 = vmatprep.subr.bf16.mxu0 %v395
  %1037 = vmatpush1.bf16.msra.mxu0 %v394
  %1038 = vmatprep.subr.bf16.mxu0 %v392
  %1039 = vmatpush1.bf16.msra.mxu0 %v391
  %1040 = vmatprep.subr.bf16.mxu0 %v389
  %1041 = vmatpush1.bf16.msra.mxu0 %v388
  %1042 = vmatprep.subr.bf16.mxu0 %v386
  %1043 = vmatpush1.bf16.msra.mxu0 %v385
  %1044 = vmatprep.subr.bf16.mxu0 %v383
  %1045 = vmatpush1.bf16.msra.mxu0 %v382
  %1046 = vmatprep.subr.bf16.mxu0 %v380
  %1047 = vmatpush1.bf16.msra.mxu0 %v379
  %1048 = vmatprep.subr.bf16.mxu0 %v425
  %1049 = vmatpush2.bf16.msra.mxu0 %v424
  %1050 = vmatprep.subr.bf16.mxu0 %v422
  %1051 = vmatpush2.bf16.msra.mxu0 %v421
  %1052 = vmatprep.subr.bf16.mxu0 %v419
  %1053 = vmatpush2.bf16.msra.mxu0 %v418
  %1054 = vmatprep.subr.bf16.mxu0 %v416
  %1055 = vmatpush2.bf16.msra.mxu0 %v415
  %1056 = vmatprep.subr.bf16.mxu0 %v413
  %1057 = vmatpush2.bf16.msra.mxu0 %v412
  %1058 = vmatprep.subr.bf16.mxu0 %v410
  %1059 = vmatpush2.bf16.msra.mxu0 %v409
  %1060 = vmatprep.subr.bf16.mxu0 %v407
  %1061 = vmatpush2.bf16.msra.mxu0 %v406
  %1062 = vmatprep.subr.bf16.mxu0 %v404
  %1063 = vmatpush2.bf16.msra.mxu0 %v403
  %1064 = vmatprep.mubr.bf16.mxu0 %v853
  %1065 = vmatmul.mubr.bf16.gmra.mxu0 %v852
  %v1066 = vpop.f32.mrf.mxu0
  %v1067 = vadd.f32 %v946, %v1066
  %v1068 = vpop.f32.mrf.mxu0
  %v1069 = vadd.f32 %v948, %v1068
  %v1070 = vpop.f32.mrf.mxu0
  %v1071 = vpop.f32.mrf.mxu0
  %1072 = vdwg.mxu0
  %1073 = vmatprep.subr.bf16.mxu0 %v449
  %1074 = vmatpush1.bf16.msra.mxu0 %v448
  %1075 = vmatprep.subr.bf16.mxu0 %v446
  %1076 = vmatpush1.bf16.msra.mxu0 %v445
  %1077 = vmatprep.subr.bf16.mxu0 %v443
  %1078 = vmatpush1.bf16.msra.mxu0 %v442
  %1079 = vmatprep.subr.bf16.mxu0 %v440
  %1080 = vmatpush1.bf16.msra.mxu0 %v439
  %1081 = vmatprep.subr.bf16.mxu0 %v437
  %1082 = vmatpush1.bf16.msra.mxu0 %v436
  %1083 = vmatprep.subr.bf16.mxu0 %v434
  %1084 = vmatpush1.bf16.msra.mxu0 %v433
  %1085 = vmatprep.subr.bf16.mxu0 %v431
  %1086 = vmatpush1.bf16.msra.mxu0 %v430
  %1087 = vmatprep.subr.bf16.mxu0 %v428
  %1088 = vmatpush1.bf16.msra.mxu0 %v427
  %1089 = vmatprep.subr.bf16.mxu0 0
  %1090 = vmatpush2.bf16.msra.mxu0 0
  %1091 = vmatprep.subr.bf16.mxu0 0
  %1092 = vmatpush2.bf16.msra.mxu0 0
  %1093 = vmatprep.subr.bf16.mxu0 0
  %1094 = vmatpush2.bf16.msra.mxu0 0
  %1095 = vmatprep.subr.bf16.mxu0 0
  %1096 = vmatpush2.bf16.msra.mxu0 0
  %1097 = vmatprep.subr.bf16.mxu0 0
  %1098 = vmatpush2.bf16.msra.mxu0 0
  %1099 = vmatprep.subr.bf16.mxu0 0
  %1100 = vmatpush2.bf16.msra.mxu0 0
  %1101 = vmatprep.subr.bf16.mxu0 0
  %1102 = vmatpush2.bf16.msra.mxu0 0
  %1103 = vmatprep.subr.bf16.mxu0 0
  %1104 = vmatpush2.bf16.msra.mxu0 0
  %1105 = vmatprep.mubr.bf16.mxu0 0
  %1106 = vmatmul.mubr.bf16.gmra.mxu0 %v854
  %v1107 = vpop.f32.mrf.mxu0
  %v1108 = vadd.f32 %v1067, %v1107
  %v1109 = vpop.f32.mrf.mxu0
  %v1110 = vadd.f32 %v1069, %v1109
  %v1111 = vpop.f32.mrf.mxu0
  %v1112 = vpop.f32.mrf.mxu0
  %1113 = vdwg.mxu0
  %1114 = vmatprep.subr.bf16.mxu0 0
  %1115 = vmatpush1.bf16.msra.mxu0 %v402
  %1116 = vmatprep.subr.bf16.mxu0 0
  %1117 = vmatpush1.bf16.msra.mxu0 %v399
  %1118 = vmatprep.subr.bf16.mxu0 0
  %1119 = vmatpush1.bf16.msra.mxu0 %v396
  %1120 = vmatprep.subr.bf16.mxu0 0
  %1121 = vmatpush1.bf16.msra.mxu0 %v393
  %1122 = vmatprep.subr.bf16.mxu0 0
  %1123 = vmatpush1.bf16.msra.mxu0 %v390
  %1124 = vmatprep.subr.bf16.mxu0 0
  %1125 = vmatpush1.bf16.msra.mxu0 %v387
  %1126 = vmatprep.subr.bf16.mxu0 0
  %1127 = vmatpush1.bf16.msra.mxu0 %v384
  %1128 = vmatprep.subr.bf16.mxu0 0
  %1129 = vmatpush1.bf16.msra.mxu0 %v381
  %1130 = vmatprep.subr.bf16.mxu0 0
  %1131 = vmatpush2.bf16.msra.mxu0 %v426
  %1132 = vmatprep.subr.bf16.mxu0 0
  %1133 = vmatpush2.bf16.msra.mxu0 %v423
  %1134 = vmatprep.subr.bf16.mxu0 0
  %1135 = vmatpush2.bf16.msra.mxu0 %v420
  %1136 = vmatprep.subr.bf16.mxu0 0
  %1137 = vmatpush2.bf16.msra.mxu0 %v417
  %1138 = vmatprep.subr.bf16.mxu0 0
  %1139 = vmatpush2.bf16.msra.mxu0 %v414
  %1140 = vmatprep.subr.bf16.mxu0 0
  %1141 = vmatpush2.bf16.msra.mxu0 %v411
  %1142 = vmatprep.subr.bf16.mxu0 0
  %1143 = vmatpush2.bf16.msra.mxu0 %v408
  %1144 = vmatprep.subr.bf16.mxu0 0
  %1145 = vmatpush2.bf16.msra.mxu0 %v405
  %1146 = vmatprep.mubr.bf16.mxu0 %v853
  %1147 = vmatmul.mubr.bf16.gmra.mxu0 %v852
  %v1148 = vpop.f32.mrf.mxu0
  %v1149 = vadd.f32 %v1027, %v1148
  %v1150 = vpop.f32.mrf.mxu0
  %v1151 = vpop.f32.mrf.mxu0
  %v1152 = vpop.f32.mrf.mxu0
  %1153 = vdwg.mxu0
  %1154 = vmatprep.subr.bf16.mxu0 0
  %1155 = vmatpush1.bf16.msra.mxu0 %v450
  %1156 = vmatprep.subr.bf16.mxu0 0
  %1157 = vmatpush1.bf16.msra.mxu0 %v447
  %1158 = vmatprep.subr.bf16.mxu0 0
  %1159 = vmatpush1.bf16.msra.mxu0 %v444
  %1160 = vmatprep.subr.bf16.mxu0 0
  %1161 = vmatpush1.bf16.msra.mxu0 %v441
  %1162 = vmatprep.subr.bf16.mxu0 0
  %1163 = vmatpush1.bf16.msra.mxu0 %v438
  %1164 = vmatprep.subr.bf16.mxu0 0
  %1165 = vmatpush1.bf16.msra.mxu0 %v435
  %1166 = vmatprep.subr.bf16.mxu0 0
  %1167 = vmatpush1.bf16.msra.mxu0 %v432
  %1168 = vmatprep.subr.bf16.mxu0 0
  %1169 = vmatpush1.bf16.msra.mxu0 %v429
  %1170 = vmatprep.subr.bf16.mxu0 0
  %1171 = vmatpush2.bf16.msra.mxu0 0
  %1172 = vmatprep.subr.bf16.mxu0 0
  %1173 = vmatpush2.bf16.msra.mxu0 0
  %1174 = vmatprep.subr.bf16.mxu0 0
  %1175 = vmatpush2.bf16.msra.mxu0 0
  %1176 = vmatprep.subr.bf16.mxu0 0
  %1177 = vmatpush2.bf16.msra.mxu0 0
  %1178 = vmatprep.subr.bf16.mxu0 0
  %1179 = vmatpush2.bf16.msra.mxu0 0
  %1180 = vmatprep.subr.bf16.mxu0 0
  %1181 = vmatpush2.bf16.msra.mxu0 0
  %1182 = vmatprep.subr.bf16.mxu0 0
  %1183 = vmatpush2.bf16.msra.mxu0 0
  %1184 = vmatprep.subr.bf16.mxu0 0
  %1185 = vmatpush2.bf16.msra.mxu0 0
  %1186 = vmatprep.mubr.bf16.mxu0 0
  %1187 = vmatmul.mubr.bf16.gmra.mxu0 %v854
  %v1188 = vpop.f32.mrf.mxu0
  %v1189 = vadd.f32 %v1149, %v1188
  %v1190 = vpop.f32.mrf.mxu0
  %v1191 = vpop.f32.mrf.mxu0
  %v1192 = vpop.f32.mrf.mxu0
  %1193 = vdwg.mxu0
  %v1194 = vmax.f32 %v761, %v763
  %v1195 = vmax.f32 %v1194, %v842
  %v1196 = vmin.f32 %v761, %v763
  %v1197 = vmin.f32 %v1196, %v842
  %v1198 = vsub.f32 %v1195, %v1197
  %vm1199 = vcmp.eq.f32.partialorder %v1198, 0.0
  %vm1200 = vcmp.eq.f32.partialorder %v1195, 0.0
  %v1201 = vsel %vm1200, 1.0, %v1195
  %v1202 = vrcp.pop %v1201
  %v1203 = vmul.f32 %v1201, %v1202
  %v1204 = vsub.f32 2.0, %v1203
  %v1205 = vmul.f32 %v1202, %v1204
  %v1206 = vmul.f32 %v1198, %v1205
  %v1207 = vsel %vm1199, 0.0, %v1206
  %v1208 = vsel %vm1199, 1.0, %v1198
  %v1209 = vrcp.pop %v1208
  %v1210 = vmul.f32 %v1208, %v1209
  %v1211 = vsub.f32 2.0, %v1210
  %v1212 = vmul.f32 %v1209, %v1211
  %v1213 = vsub.f32 %v763, %v842
  %v1214 = vmul.f32 %v1213, %v1212
  %v1215 = vsub.f32 %v842, %v761
  %v1216 = vmul.f32 %v1215, %v1212
  %v1217 = vadd.f32 %v1216, 2.0
  %v1218 = vsub.f32 %v761, %v763
  %v1219 = vmul.f32 %v1218, %v1212
  %v1220 = vadd.f32 %v1219, 4.0
  %vm1221 = vcmp.eq.f32.partialorder %v842, %v1195
  %vm1222 = vcmp.eq.f32.partialorder %v763, %v1195
  %v1223 = vsel %vm1222, %v1217, %v1214
  %v1224 = vsel %vm1221, %v1220, %v1223
  %v1225 = vmul.f32 %v1224, 0.16666667
  %v1226 = vfloor.f32 %v1225
  %v1227 = vsub.f32 %v1225, %v1226
  %v1228 = vsel %vm1199, 0.0, %v1227
  %v1229 = vmax.f32 %v1108, %v1110
  %v1230 = vmax.f32 %v1229, %v1189
  %v1231 = vmin.f32 %v1108, %v1110
  %v1232 = vmin.f32 %v1231, %v1189
  %v1233 = vsub.f32 %v1230, %v1232
  %vm1234 = vcmp.eq.f32.partialorder %v1233, 0.0
  %vm1235 = vcmp.eq.f32.partialorder %v1230, 0.0
  %v1236 = vsel %vm1235, 1.0, %v1230
  %v1237 = vrcp.pop %v1236
  %v1238 = vmul.f32 %v1236, %v1237
  %v1239 = vsub.f32 2.0, %v1238
  %v1240 = vmul.f32 %v1237, %v1239
  %v1241 = vmul.f32 %v1233, %v1240
  %v1242 = vsel %vm1234, 0.0, %v1241
  %v1243 = vsel %vm1234, 1.0, %v1233
  %v1244 = vrcp.pop %v1243
  %v1245 = vmul.f32 %v1243, %v1244
  %v1246 = vsub.f32 2.0, %v1245
  %v1247 = vmul.f32 %v1244, %v1246
  %v1248 = vsub.f32 %v1110, %v1189
  %v1249 = vmul.f32 %v1248, %v1247
  %v1250 = vsub.f32 %v1189, %v1108
  %v1251 = vmul.f32 %v1250, %v1247
  %v1252 = vadd.f32 %v1251, 2.0
  %v1253 = vsub.f32 %v1108, %v1110
  %v1254 = vmul.f32 %v1253, %v1247
  %v1255 = vadd.f32 %v1254, 4.0
  %vm1256 = vcmp.eq.f32.partialorder %v1189, %v1230
  %vm1257 = vcmp.eq.f32.partialorder %v1110, %v1230
  %v1258 = vsel %vm1257, %v1252, %v1249
  %v1259 = vsel %vm1256, %v1255, %v1258
  %v1260 = vmul.f32 %v1259, 0.16666667
  %v1261 = vfloor.f32 %v1260
  %v1262 = vsub.f32 %v1260, %v1261
  %v1263 = vsel %vm1234, 0.0, %v1262
  %v1264 = vsub.f32 %v1228, %v1263
  %v1265 = vsub.f32 %v1207, %v1242
  %v1266 = vsub.f32 %v1195, %v1230
  %v1267 = vmul.f32 %v1264, %v1264
  %v1268 = vmul.f32 %v1265, %v1265
  %v1269 = vadd.f32 %v1267, %v1268
  %v1270 = vmul.f32 %v1266, %v1266
  %v1271 = vadd.f32 %v1269, %v1270
  %v1272 = vrsqrt.pop %v1271
  %v1273 = vmul.f32 %v1271, %v1272
  %vm1274 = vcmp.eq.f32.partialorder %v1271, inf
  %v1275 = vsel %vm1274, %v1271, %v1273
  %vm1276 = vcmp.eq.f32.partialorder %v1271, 0.0
  %v1277 = vand.u32 %v1271, 2147483648
  %v1278 = vsel %vm1276, %v1277, %v1275
  %v1279 = vmul.f32 %v1278, -3.0
  %v1280 = vmul.f32 %v1279, 1.442695
  %v1281 = vpow.pop %v1280
  %v1282 = vstv %s19
  %v1283 = vmul.f32 %v1282, %v1281
  %1284 = vst [vmem:[%s4] sm:$0xf] %v1283
  // Predicated region
  $region18: #{bg_guided_sparsity_weights.1} parent=0 // pred_check
    _
  $region19: #{bg_guided_sparsity_weights.1} parent=0 // pred_check_branch
    %1286 = sbr.rel (0) target = $region21
  $region20: #{bg_guided_sparsity_weights.1} parent=0 // pred_region
    _
  $region21: #{bg_guided_sparsity_weights.1} parent=0 // pred_fallthru
    _
  // Predicated region
  $region22: #{bg_guided_sparsity_weights.1} parent=0 // pred_check
    _
  $region23: #{bg_guided_sparsity_weights.1} parent=0 // pred_check_branch
    %1288 = sbr.rel (0) target = $region25
  $region24: #{bg_guided_sparsity_weights.1} parent=0 // pred_region
    _
  $region25: #{bg_guided_sparsity_weights.1} parent=0 // pred_fallthru
    _

</llo_original>
